<compile_context>
chip_gen: v5e
topology: v5e:2x2
jax: 0.10.0
libtpu: 0.0.40
codegen_flags: <defaults>
</compile_context>

<pallas_src>
import functools

import jax
import jax.numpy as jnp
from jax.experimental import pallas as pl
from jax.experimental.pallas import tpu as pltpu


def _round_up(x, m):
    return (x + m - 1) // m * m


def _pooler_kernel(x_ref, w_ref, b_ref, o_ref, *, bf16_tanh):
    # x_ref: (TB, H) CLS rows; w_ref: (H, H) pre-transposed to (in, out);
    # b_ref: (1, H) f32; o_ref: (TB, H).
    x = x_ref[...].astype(w_ref.dtype)           # MXU operand cast, in-kernel
    # Standard K-major contraction: native MXU matmul, f32 accumulation,
    # no in-kernel transpose of the weight.
    y = jnp.dot(x, w_ref[...], preferred_element_type=jnp.float32)
    y = y + b_ref[...].astype(jnp.float32)       # bias add in f32 (VPU)
    if bf16_tanh:
        # bf16-native EUP (v6e/v7x): halves tanh pushes; direct store.
        o_ref[...] = jnp.tanh(y.astype(jnp.bfloat16)).astype(o_ref.dtype)
    else:
        o_ref[...] = jnp.tanh(y).astype(o_ref.dtype)


def _tpu_info():
    """(vmem_capacity_bytes, chip_name) with conservative fallbacks."""
    try:
        info = pltpu.get_tpu_info()
        vmem = int(getattr(info, "vmem_capacity_bytes", 64 << 20))
        name = str(getattr(info, "chip_version", ""))
        return vmem, name
    except Exception:
        return 64 << 20, ""   # conservative: v7x per-TC physical VMEM


def bert_pooler(hidden_states, weight, bias, *, block_b=512, mxu_dtype=None):
    """BertPooler forward: tanh(hidden_states[:, 0, :] @ weight.T + bias).

    hidden_states: (B, S, H); weight: (H, H) PyTorch (out, in) layout;
    bias: (H,).  Output dtype == hidden_states.dtype.  mxu_dtype=None (default)
    keeps exact f32 PyTorch numerics; pass jnp.bfloat16 to halve weight HBM
    traffic on this mem-bound kernel.
    """
    B, S, H = hidden_states.shape
    assert weight.shape == (H, H) and bias.shape == (H,)

    out_dtype = hidden_states.dtype
    x_bytes = jnp.dtype(hidden_states.dtype).itemsize
    o_bytes = jnp.dtype(out_dtype).itemsize

    # Pre-transpose the weight once in XLA to (in, out); when casting to bf16
    # the transpose fuses with the cast into the same one-time HBM pass, so
    # the MXU always sees a K-major RHS.
    w = weight.T if mxu_dtype is None else weight.T.astype(mxu_dtype)
    w_bytes = jnp.dtype(w.dtype).itemsize
    b2d = bias.astype(jnp.float32).reshape(1, H)

    # Free, row-major view: the CLS token of sequence b is exactly the first
    # H lanes of row b, so the kernel DMAs only the (TB, H) CLS slab.
    # (Do NOT cast hidden_states here: that would materialize a full (B,S,H)
    # copy; the activation cast stays fused in-kernel.)
    hs2d = hidden_states.reshape(B, S * H)

    vmem_cap, chip = _tpu_info()

    # --- Batch-tile selection -------------------------------------------
    # Cap the tile so double-buffered x/out + single-buffered weight fit in
    # ~half the per-core VMEM (headroom for compiler scratch).  This keeps a
    # v5e/v6e-tuned block_b from exhausting v7x's 64 MiB VMEM.
    fixed_bytes = H * H * w_bytes + _round_up(H * 4, 4096)   # weight (1 buf) + bias
    per_row = 2 * H * x_bytes + 2 * H * o_bytes              # 2-buf x + 2-buf out
    tb_cap = max(8, ((vmem_cap // 2 - fixed_bytes) // max(per_row, 1)) // 8 * 8)
    block_b = max(8, min(block_b, tb_cap) // 8 * 8)

    # Only split into >=2 grid steps (=> both v7x TensorCores via "parallel")
    # when CLS-slab traffic exceeds the weight fetch each core would duplicate.
    slab_traffic = B * H * (x_bytes + o_bytes)
    weight_traffic = H * H * w_bytes
    if B <= block_b:
        if B > 8 and slab_traffic > weight_traffic:
            TB = min(block_b, _round_up(pl.cdiv(B, 2), 8))
        else:
            TB = B                 # block == full dim: layout-legal for any B
    else:
        TB = block_b
    grid = (pl.cdiv(B, TB),)

    vmem_limit = int(min(vmem_cap, fixed_bytes + per_row * TB + (4 << 20)))

    # bf16 tanh only when output is bf16 and the chip has a bf16 EUP (not v5e).
    bf16_tanh = (out_dtype == jnp.bfloat16) and ("v5" not in chip.lower())
    kernel = functools.partial(_pooler_kernel, bf16_tanh=bf16_tanh)

    cost = pl.CostEstimate(
        flops=2 * B * H * H,
        transcendentals=B * H,
        bytes_accessed=B * H * (x_bytes + o_bytes) + H * H * w_bytes + H * 4)

    def _call(single_buffer_consts):
        if single_buffer_consts:
            # Constant block index -> second pipeline buffer is dead VMEM.
            w_spec = pl.BlockSpec((H, H), lambda i: (0, 0),
                                  pipeline_mode=pl.Buffered(1))
            b_spec = pl.BlockSpec((1, H), lambda i: (0, 0),
                                  pipeline_mode=pl.Buffered(1))
        else:
            w_spec = pl.BlockSpec((H, H), lambda i: (0, 0))
            b_spec = pl.BlockSpec((1, H), lambda i: (0, 0))
        return pl.pallas_call(
            kernel,
            out_shape=jax.ShapeDtypeStruct((B, H), out_dtype),
            grid=grid,
            in_specs=[
                # CLS slab: rows [i*TB, (i+1)*TB), lanes [0, H) of (B, S*H).
                pl.BlockSpec((TB, H), lambda i: (i, 0)),
                w_spec,
                b_spec,
            ],
            out_specs=pl.BlockSpec((TB, H), lambda i: (i, 0)),
            compiler_params=pltpu.CompilerParams(
                dimension_semantics=("parallel",),
                vmem_limit_bytes=vmem_limit),
            cost_estimate=cost,
        )(hs2d, w, b2d)

    try:
        return _call(True)
    except Exception:
        # Portable fallback if Buffered(1) is rejected by this jax/Mosaic build.
        return _call(False)


if __name__ == "__main__":
    # Small, lane/sublane-aligned demo shapes: batch=16, seq=8, hidden=128.
    # block_b=8 forces the batch grid to iterate (grid=(2,)).
    B, S, H = 16, 8, 128
    key = jax.random.PRNGKey(0)
    k_x, k_w, k_b = jax.random.split(key, 3)

    hidden_states = jax.random.normal(k_x, (B, S, H), dtype=jnp.float32)
    # nn.Linear(H, H) params in PyTorch (out, in) layout.
    weight = jax.random.normal(k_w, (H, H), dtype=jnp.float32) * 0.02
    bias = jax.random.normal(k_b, (H,), dtype=jnp.float32) * 0.02

    # Reference (same semantics as the PyTorch forward), in f32.
    ref = jnp.tanh(hidden_states[:, 0, :] @ weight.T + bias)

    # Default path: exact f32 (matches PyTorch numerics).
    out = bert_pooler(hidden_states, weight, bias, block_b=8)
    out = jax.block_until_ready(out)
    assert out.shape == (B, H) and out.dtype == hidden_states.dtype
    assert jnp.allclose(out, ref, atol=1e-5, rtol=1e-5)

    # Opt-in bf16-operand path (f32 accumulate + f32 epilogue): looser tol.
    out_bf16 = bert_pooler(hidden_states, weight, bias, block_b=8,
                           mxu_dtype=jnp.bfloat16)
    out_bf16 = jax.block_until_ready(out_bf16)
    assert out_bf16.shape == (B, H) and out_bf16.dtype == hidden_states.dtype
    assert jnp.allclose(out_bf16, ref, atol=2e-2, rtol=2e-2)

    # TODO(synk): for tiny-batch inference the remaining lever is caching /
    # prefetching the weight across calls (P10) or fusing into the downstream
    # classifier matmul, not further tiling of this kernel.
    print("KERNEL_OK")
</pallas_src>

<mosaic_0001>
module attributes {stable_mosaic.version = 11 : i64} {
  func.func @_pooler_kernel(%arg0: i32, %arg1: memref<8x128xf32, #tpu.memory_space<vmem>>, %arg2: memref<128x128xf32, #tpu.memory_space<vmem>>, %arg3: memref<1x128xf32, #tpu.memory_space<vmem>>, %arg4: memref<8x128xf32, #tpu.memory_space<vmem>>) attributes {dimension_semantics = [#tpu.dimension_semantics<parallel>], iteration_bounds = array<i64: 2>, scalar_prefetch = 0 : i64, scratch_operands = 0 : i64, tpu.core_type = #tpu.core_type<tc>, window_params = [{transform_indices = @transform_0, window_bounds = array<i64: 8, 128>}, {pipeline_mode = #tpu.pipeline_mode<synchronous>, transform_indices = @transform_1, window_bounds = array<i64: 128, 128>}, {pipeline_mode = #tpu.pipeline_mode<synchronous>, transform_indices = @transform_2, window_bounds = array<i64: 1, 128>}, {transform_indices = @transform_3, window_bounds = array<i64: 8, 128>}]} {
    %c0 = arith.constant 0 : index
    %c0_0 = arith.constant 0 : index
    %0 = vector.load %arg1[%c0, %c0_0] : memref<8x128xf32, #tpu.memory_space<vmem>>, vector<8x128xf32>
    %c0_1 = arith.constant 0 : index
    %c0_2 = arith.constant 0 : index
    %1 = vector.load %arg2[%c0_1, %c0_2] : memref<128x128xf32, #tpu.memory_space<vmem>>, vector<128x128xf32>
    %cst = arith.constant dense<0.000000e+00> : vector<8x128xf32>
    %2 = tpu.matmul %0, %1, %cst {dimension_numbers = #tpu.dot_dimension_numbers<[1], [0], [0], [1], [0, 0, 1, 1], [], []>} : vector<8x128xf32>, vector<128x128xf32>, vector<8x128xf32> -> vector<8x128xf32>
    %c0_3 = arith.constant 0 : index
    %c0_4 = arith.constant 0 : index
    %3 = vector.load %arg3[%c0_3, %c0_4] : memref<1x128xf32, #tpu.memory_space<vmem>>, vector<1x128xf32>
    %4 = vector.broadcast %3 : vector<1x128xf32> to vector<8x128xf32>
    %5 = arith.addf %2, %4 : vector<8x128xf32>
    %6 = math.tanh %5 : vector<8x128xf32>
    %c0_5 = arith.constant 0 : index
    %c0_6 = arith.constant 0 : index
    %7 = vector.load %arg4[%c0_5, %c0_6] : memref<8x128xf32, #tpu.memory_space<vmem>>, vector<8x128xf32>
    tpu.vector_store %arg4[%c0_5, %c0_6], %6 {strides = array<i32>} : memref<8x128xf32, #tpu.memory_space<vmem>>, vector<8x128xf32>,
    return
  }
  func.func @transform_0(%arg0: i32) -> (i32, i32) {
    %c0_i32 = arith.constant 0 : i32
    %c0_i32_0 = arith.constant 0 : i32
    return %arg0, %c0_i32 : i32, i32
  }
  func.func @transform_1(%arg0: i32) -> (i32, i32) {
    %c0_i32 = arith.constant 0 : i32
    %c0_i32_0 = arith.constant 0 : i32
    %c0_i32_1 = arith.constant 0 : i32
    return %c0_i32, %c0_i32_0 : i32, i32
  }
  func.func @transform_2(%arg0: i32) -> (i32, i32) {
    %c0_i32 = arith.constant 0 : i32
    %c0_i32_0 = arith.constant 0 : i32
    %c0_i32_1 = arith.constant 0 : i32
    return %c0_i32, %c0_i32_0 : i32, i32
  }
  func.func @transform_3(%arg0: i32) -> (i32, i32) {
    %c0_i32 = arith.constant 0 : i32
    %c0_i32_0 = arith.constant 0 : i32
    return %arg0, %c0_i32 : i32, i32
  }
}

module attributes {stable_mosaic.version = 11 : i64} {
  func.func @_pooler_kernel(%arg0: i32, %arg1: memref<8x128xf32, #tpu.memory_space<vmem>>, %arg2: memref<128x128xf32, #tpu.memory_space<vmem>>, %arg3: memref<1x128xf32, #tpu.memory_space<vmem>>, %arg4: memref<8x128xf32, #tpu.memory_space<vmem>>) attributes {dimension_semantics = [#tpu.dimension_semantics<parallel>], iteration_bounds = array<i64: 2>, scalar_prefetch = 0 : i64, scratch_operands = 0 : i64, tpu.core_type = #tpu.core_type<tc>, window_params = [{transform_indices = @transform_0, window_bounds = array<i64: 8, 128>}, {pipeline_mode = #tpu.pipeline_mode<synchronous>, transform_indices = @transform_1, window_bounds = array<i64: 128, 128>}, {pipeline_mode = #tpu.pipeline_mode<synchronous>, transform_indices = @transform_2, window_bounds = array<i64: 1, 128>}, {transform_indices = @transform_3, window_bounds = array<i64: 8, 128>}]} {
    %c0 = arith.constant 0 : index
    %c0_0 = arith.constant 0 : index
    %0 = vector.load %arg1[%c0, %c0_0] : memref<8x128xf32, #tpu.memory_space<vmem>>, vector<8x128xf32>
    %c0_1 = arith.constant 0 : index
    %c0_2 = arith.constant 0 : index
    %1 = vector.load %arg2[%c0_1, %c0_2] : memref<128x128xf32, #tpu.memory_space<vmem>>, vector<128x128xf32>
    %cst = arith.constant dense<0.000000e+00> : vector<8x128xf32>
    %2 = tpu.matmul %0, %1, %cst {dimension_numbers = #tpu.dot_dimension_numbers<[1], [0], [0], [1], [0, 0, 1, 1], [], []>} : vector<8x128xf32>, vector<128x128xf32>, vector<8x128xf32> -> vector<8x128xf32>
    %c0_3 = arith.constant 0 : index
    %c0_4 = arith.constant 0 : index
    %3 = vector.load %arg3[%c0_3, %c0_4] : memref<1x128xf32, #tpu.memory_space<vmem>>, vector<1x128xf32>
    %4 = vector.broadcast %3 : vector<1x128xf32> to vector<8x128xf32>
    %5 = arith.addf %2, %4 : vector<8x128xf32>
    %6 = math.tanh %5 : vector<8x128xf32>
    %c0_5 = arith.constant 0 : index
    %c0_6 = arith.constant 0 : index
    %7 = vector.load %arg4[%c0_5, %c0_6] : memref<8x128xf32, #tpu.memory_space<vmem>>, vector<8x128xf32>
    tpu.vector_store %arg4[%c0_5, %c0_6], %6 {strides = array<i32>} : memref<8x128xf32, #tpu.memory_space<vmem>>, vector<8x128xf32>,
    return
  }
  func.func @transform_0(%arg0: i32) -> (i32, i32) {
    %c0_i32 = arith.constant 0 : i32
    %c0_i32_0 = arith.constant 0 : i32
    return %arg0, %c0_i32 : i32, i32
  }
  func.func @transform_1(%arg0: i32) -> (i32, i32) {
    %c0_i32 = arith.constant 0 : i32
    %c0_i32_0 = arith.constant 0 : i32
    %c0_i32_1 = arith.constant 0 : i32
    return %c0_i32, %c0_i32_0 : i32, i32
  }
  func.func @transform_2(%arg0: i32) -> (i32, i32) {
    %c0_i32 = arith.constant 0 : i32
    %c0_i32_0 = arith.constant 0 : i32
    %c0_i32_1 = arith.constant 0 : i32
    return %c0_i32, %c0_i32_0 : i32, i32
  }
  func.func @transform_3(%arg0: i32) -> (i32, i32) {
    %c0_i32 = arith.constant 0 : i32
    %c0_i32_0 = arith.constant 0 : i32
    return %arg0, %c0_i32 : i32, i32
  }
}

</mosaic_0001>

<llo_original>
// kernel: tpu_custom_call.1
$region0: #{tpu_custom_call.1}
  #allocation0 [shape = 'u32[]', space=smem, size = 0x4, offset = 0x4, fixed_abs, tag = 'smem constant byte address 0x4 - core index']
  #allocation1 [shape = 'u32[72,128]{1,0:T(1,128)}', space=vmem, size = 0x9000, scoped, tag = 'internal scratch']
  %s0 = inlined_call_operand.hbm [shape: f32[16,1024], index: 0, kind: input, shape index: {}]
  %s1 = inlined_call_operand.hbm [shape: f32[128,128], index: 1, kind: input, shape index: {}]
  %s2 = inlined_call_operand.vmem [shape: f32[1,128], index: 2, kind: input, shape index: {}]
  %s3 = inlined_call_operand.hbm [shape: f32[16,128], index: 3, kind: output, shape index: {}]
  %s4 = sld [smem:[#allocation0]]
  $region53: #{tpu_custom_call.1} parent=0
    _
  %s6 = ssub.s32 1, %s4
  %s7 = scalar_select 0, %s6, %s4
  $region1: #{tpu_custom_call.1} parent=0
    #allocation2 [shape = 'u8[8192]{0}', space=vmem, size = 0x2000, scoped, tag = 'input window, operand 0']
    #allocation3 [shape = 's32[2]{0}', space=sflag, size = 0x8, scoped, tag = 'scoped memory for tpu_custom_call.1']
    #allocation4 [shape = 's32[2]{0}', space=sflag, size = 0x8, scoped, tag = 'scoped memory for tpu_custom_call.1']
    #allocation5 [shape = 'u8[65536]{0}', space=vmem, size = 0x10000, scoped, tag = 'input window, operand 1, single buffered']
    #allocation6 [shape = 's32[1]{0}', space=sflag, size = 0x4, scoped, tag = 'scoped memory for tpu_custom_call.1']
    #allocation7 [shape = 'u8[8192]{0}', space=vmem, size = 0x2000, scoped, tag = 'output window, operand 0']
    %8 = vsyncpa [#allocation3], 0
    %s9 = scalar_lea.sflag [#allocation3], 1
    %10 = vsyncpa %s9, 0
    %11 = vsyncpa [#allocation6], 0
    %12 = vsyncpa [#allocation4], 0
    %s13 = scalar_lea.sflag [#allocation4], 1
    %14 = vsyncpa %s13, 0
    loop: start=0, step=1, limit=4
    $region2: #{tpu_custom_call.1} parent=1 // loop_pre_header
      _
    $region3: #{tpu_custom_call.1} parent=1 // loop_header
      %s16 = sphi 0, %s20
      %p17 = scmp.ge.s32.totalorder %s16, 4
      %s26 = sphi 0, %s28
      %s29 = sphi 0, %s26
      %s30 = sphi 0, %s29
      %s46 = sphi 0, %s30
      %s50 = sphi 0, %s50
      %s52 = sphi 0, %s50
      %s53 = sphi 0, %s52
      %s67 = sphi 0, %s53
      %s71 = sphi 0, %s71
      %s73 = sphi 0, %s71
      %s74 = sphi 0, %s73
      %s88 = sphi 0, %s74
      %s94 = sphi 0, %s96
      %s97 = sphi 0, %s94
      %s98 = sphi 0, %s97
      %s114 = sphi 0, %s98
    $region4: #{tpu_custom_call.1} parent=1 // loop_header_branch
      %19 = sbr.rel (%p17) target = $region8
    $region5: #{tpu_custom_call.1} parent=1 // loop_body
      %s21 = ssub.s32 %s16, 1
      %s22 = ssub.s32 %s16, 2
      %s23 = sadd.s32 %s16, 1
      %s24 = ssub.s32 %s16, %s23
      %p25 = scmp.eq.s32.totalorder %s24, 0
      %s27 = sadd.s32 %s26, 1
      %s28 = scalar_select %p25, %s26, %s27
      %p31 = pneg %p25
      %p32 = scmp.eq.s32.totalorder %s16, 1
      %p33 = por %p31, %p32
      %p34 = scmp.ne.s32.totalorder %s26, %s29
      %p35 = scmp.eq.s32.totalorder %s16, 0
      %p36 = por %p34, %p35
      %p37 = scmp.ne.s32.totalorder %s26, %s29
      %p38 = scmp.eq.s32.totalorder %s21, 1
      %p39 = por %p37, %p38
      %p40 = scmp.ne.s32.totalorder %s29, %s30
      %p41 = scmp.eq.s32.totalorder %s21, 0
      %p42 = por %p40, %p41
      %p43 = scmp.ne.s32.totalorder %s29, %s30
      %p44 = scmp.eq.s32.totalorder %s22, 1
      %p45 = por %p43, %p44
      %p47 = scmp.ne.s32.totalorder %s30, %s46
      %p48 = scmp.eq.s32.totalorder %s22, 0
      %p49 = por %p47, %p48
      %s51 = sadd.s32 %s50, 1
      %p54 = scmp.eq.s32.totalorder %s16, 1
      %p55 = scmp.ne.s32.totalorder %s50, %s52
      %p56 = scmp.eq.s32.totalorder %s16, 0
      %p57 = por %p55, %p56
      %p58 = scmp.ne.s32.totalorder %s50, %s52
      %p59 = scmp.eq.s32.totalorder %s21, 1
      %p60 = por %p58, %p59
      %p61 = scmp.ne.s32.totalorder %s52, %s53
      %p62 = scmp.eq.s32.totalorder %s21, 0
      %p63 = por %p61, %p62
      %p64 = scmp.ne.s32.totalorder %s52, %s53
      %p65 = scmp.eq.s32.totalorder %s22, 1
      %p66 = por %p64, %p65
      %p68 = scmp.ne.s32.totalorder %s53, %s67
      %p69 = scmp.eq.s32.totalorder %s22, 0
      %p70 = por %p68, %p69
      %s72 = sadd.s32 %s71, 1
      %p75 = scmp.eq.s32.totalorder %s16, 1
      %p76 = scmp.ne.s32.totalorder %s71, %s73
      %p77 = scmp.eq.s32.totalorder %s16, 0
      %p78 = por %p76, %p77
      %p79 = scmp.ne.s32.totalorder %s71, %s73
      %p80 = scmp.eq.s32.totalorder %s21, 1
      %p81 = por %p79, %p80
      %p82 = scmp.ne.s32.totalorder %s73, %s74
      %p83 = scmp.eq.s32.totalorder %s21, 0
      %p84 = por %p82, %p83
      %p85 = scmp.ne.s32.totalorder %s73, %s74
      %p86 = scmp.eq.s32.totalorder %s22, 1
      %p87 = por %p85, %p86
      %p89 = scmp.ne.s32.totalorder %s74, %s88
      %p90 = scmp.eq.s32.totalorder %s22, 0
      %p91 = por %p89, %p90
      %s92 = ssub.s32 %s16, %s23
      %p93 = scmp.eq.s32.totalorder %s92, 0
      %s95 = sadd.s32 %s94, 1
      %s96 = scalar_select %p93, %s94, %s95
      %p99 = pneg %p93
      %p100 = scmp.eq.s32.totalorder %s16, 1
      %p101 = por %p99, %p100
      %p102 = scmp.ne.s32.totalorder %s94, %s97
      %p103 = scmp.eq.s32.totalorder %s16, 0
      %p104 = por %p102, %p103
      %p105 = scmp.ne.s32.totalorder %s94, %s97
      %p106 = scmp.eq.s32.totalorder %s21, 1
      %p107 = por %p105, %p106
      %p108 = scmp.ne.s32.totalorder %s97, %s98
      %p109 = scmp.eq.s32.totalorder %s21, 0
      %p110 = por %p108, %p109
      %p111 = scmp.ne.s32.totalorder %s97, %s98
      %p112 = scmp.eq.s32.totalorder %s22, 1
      %p113 = por %p111, %p112
      %p115 = scmp.ne.s32.totalorder %s98, %s114
      %p116 = scmp.eq.s32.totalorder %s22, 0
      %p117 = por %p115, %p116
      %p118 = scmp.le.s32.totalorder 1, %s16
      %p119 = scmp.lt.s32.totalorder %s16, 3
      %p120 = pnand %p118, %p119
      %p121 = pneg %p120
      // Predicated region
      $region9: #{tpu_custom_call.1} parent=5 // pred_check
        _
      $region10: #{tpu_custom_call.1} parent=5 // pred_check_branch
        %123 = sbr.rel (%p120) target = $region12
      $region11: #{tpu_custom_call.1} parent=5 // pred_region
        %s124 = ssub.s32 %s16, 1
        // Predicated region
        $region13: #{tpu_custom_call.1} parent=11 // pred_check
          %p125 = pneg %p63
        $region14: #{tpu_custom_call.1} parent=11 // pred_check_branch
          %127 = sbr.rel (%p125) target = $region16
        $region15: #{tpu_custom_call.1} parent=11 // pred_region
          %129 = vsyncadd [#allocation6], 0
          %s130 = sshll.u32 %s1, 4
          %s131 = int_to_ptr.hbm [resolvable:$true] %s130
          %s132 = sshll.u32 [#allocation5], 4
          %s133 = int_to_ptr.vmem [resolvable:$true] %s132
          %138 = dma.hbm_to_vmem [thread:$0]  %s131, 2048, %s133, [#allocation6], 128, 128, 8
        $region16: #{tpu_custom_call.1} parent=11 // pred_fallthru
          _
        // Predicated region
        $region17: #{tpu_custom_call.1} parent=11 // pred_check
          %p139 = pneg %p84
        $region18: #{tpu_custom_call.1} parent=11 // pred_check_branch
          %141 = sbr.rel (%p139) target = $region20
        $region19: #{tpu_custom_call.1} parent=11 // pred_region
          _
        $region20: #{tpu_custom_call.1} parent=11 // pred_fallthru
          _
      $region12: #{tpu_custom_call.1} parent=5 // pred_fallthru
        _
      %p142 = scmp.lt.s32.totalorder %s16, 2
      // Predicated region
      $region21: #{tpu_custom_call.1} parent=5 // pred_check
        %p143 = pneg %p142
      $region22: #{tpu_custom_call.1} parent=5 // pred_check_branch
        %145 = sbr.rel (%p143) target = $region24
      $region23: #{tpu_custom_call.1} parent=5 // pred_region
        // Predicated region
        $region25: #{tpu_custom_call.1} parent=23 // pred_check
          %p146 = pneg %p36
        $region26: #{tpu_custom_call.1} parent=23 // pred_check_branch
          %148 = sbr.rel (%p146) target = $region28
        $region27: #{tpu_custom_call.1} parent=23 // pred_region
          %s149 = sand.u32 %s26, 1
          %s150 = scalar_lea.sflag [#allocation3], %s149
          %s151 = sand.u32 %s26, 1
          %s152 = smul.addr %s151, 8
          %s153 = scalar_lea.vmem [#allocation2], %s152
          %155 = vsyncadd %s150, 0
          %s156 = smul.addr %s16, 8
          %s157 = smul.addr %s156, 8
          %s158 = scalar_lea.hbm %s0, %s157
          %s160 = sshll.u32 %s158, 4
          %s161 = int_to_ptr.hbm [resolvable:$true] %s160
          %s162 = sshll.u32 %s153, 4
          %s163 = int_to_ptr.vmem [resolvable:$true] %s162
          %165 = dma.hbm_to_vmem [thread:$0]  %s161, 128, %s163, %s150
        $region28: #{tpu_custom_call.1} parent=23 // pred_fallthru
          _
      $region24: #{tpu_custom_call.1} parent=5 // pred_fallthru
        _
      %p166 = scmp.le.s32.totalorder 1, %s16
      %p167 = scmp.lt.s32.totalorder %s16, 3
      %p168 = pnand %p166, %p167
      %p169 = pneg %p168
      // Predicated region
      $region29: #{tpu_custom_call.1} parent=5 // pred_check
        _
      $region30: #{tpu_custom_call.1} parent=5 // pred_check_branch
        %171 = sbr.rel (%p168) target = $region32
      $region31: #{tpu_custom_call.1} parent=5 // pred_region
        %s172 = ssub.s32 %s16, 1
        %s173 = sand.u32 %s29, 1
        %s174 = scalar_lea.sflag [#allocation3], %s173
        %s175 = sand.u32 %s29, 1
        %s176 = smul.addr %s175, 8
        %s177 = scalar_lea.vmem [#allocation2], %s176
        // Predicated region
        $region33: #{tpu_custom_call.1} parent=31 // pred_check
          %p178 = pneg %p42
        $region34: #{tpu_custom_call.1} parent=31 // pred_check_branch
          %180 = sbr.rel (%p178) target = $region36
        $region35: #{tpu_custom_call.1} parent=31 // pred_region
          %182 = dma.done %s174, 128
        $region36: #{tpu_custom_call.1} parent=31 // pred_fallthru
          _
        // Predicated region
        $region37: #{tpu_custom_call.1} parent=31 // pred_check
          %p183 = pneg %p63
        $region38: #{tpu_custom_call.1} parent=31 // pred_check_branch
          %185 = sbr.rel (%p183) target = $region40
        $region39: #{tpu_custom_call.1} parent=31 // pred_region
          %187 = dma.done [#allocation6], 2048
        $region40: #{tpu_custom_call.1} parent=31 // pred_fallthru
          _
        %s188 = sand.u32 %s29, 1
        %s189 = scalar_lea.sflag [#allocation3], %s188
        %s190 = sand.u32 %s29, 1
        %s191 = smul.addr %s190, 8
        %s192 = scalar_lea.vmem [#allocation2], %s191
        %p193 = pneg %p42
        %p194 = pneg %p39
        %p195 = pneg %p63
        %p196 = pneg %p60
        %p197 = pneg %p84
        %p198 = pneg %p81
        %p199 = pneg %p110
        %p200 = pneg %p107
        %s201 = sand.u32 %s97, 1
        %s202 = scalar_lea.sflag [#allocation4], %s201
        %s203 = sand.u32 %s97, 1
        %s204 = smul.addr %s203, 8
        %s205 = scalar_lea.vmem [#allocation7], %s204
        %v206 = vld [vmem:[%s177] sm:$0xff]
        %v207 = vld [vmem:[#allocation5] sm:$0xff]
        %v208 = vld [vmem:[#allocation5 + $0x8] sm:$0xff]
        %v209 = vld [vmem:[#allocation5 + $0x10] sm:$0xff]
        %v210 = vld [vmem:[#allocation5 + $0x18] sm:$0xff]
        %v211 = vld [vmem:[#allocation5 + $0x20] sm:$0xff]
        %v212 = vld [vmem:[#allocation5 + $0x28] sm:$0xff]
        %v213 = vld [vmem:[#allocation5 + $0x30] sm:$0xff]
        %v214 = vld [vmem:[#allocation5 + $0x38] sm:$0xff]
        %v215 = vld [vmem:[#allocation5 + $0x40] sm:$0xff]
        %v216 = vld [vmem:[#allocation5 + $0x48] sm:$0xff]
        %v217 = vld [vmem:[#allocation5 + $0x50] sm:$0xff]
        %v218 = vld [vmem:[#allocation5 + $0x58] sm:$0xff]
        %v219 = vld [vmem:[#allocation5 + $0x60] sm:$0xff]
        %v220 = vld [vmem:[#allocation5 + $0x68] sm:$0xff]
        %v221 = vld [vmem:[#allocation5 + $0x70] sm:$0xff]
        %v222 = vld [vmem:[#allocation5 + $0x78] sm:$0xff]
        %v223 = vld [vmem:[%s2] sm:$0x1]
        %v225 = vperm.slane %v223, 0
        %227 = vmatpush.msra.mxu0 %v222
        %228 = vmatpush.msra.mxu0 %v221
        %229 = vmatpush.msra.mxu0 %v220
        %230 = vmatpush.msra.mxu0 %v219
        %231 = vmatpush.msra.mxu0 %v218
        %232 = vmatpush.msra.mxu0 %v217
        %233 = vmatpush.msra.mxu0 %v216
        %234 = vmatpush.msra.mxu0 %v215
        %235 = vmatpush.msra.mxu0 %v214
        %236 = vmatpush.msra.mxu0 %v213
        %237 = vmatpush.msra.mxu0 %v212
        %238 = vmatpush.msra.mxu0 %v211
        %239 = vmatpush.msra.mxu0 %v210
        %240 = vmatpush.msra.mxu0 %v209
        %241 = vmatpush.msra.mxu0 %v208
        %242 = vmatpush.msra.mxu0 %v207
        %243 = vmatmul.f32.gmra.mxu0 %v206
        %v244 = vpop.f32.mrf.mxu0
        %v245 = vadd.f32 %v225, %v244
        %246 = vdwg.mxu0
        %v247 = vtanh.pop %v245
        %248 = vst [vmem:[%s205] sm:$0xff] %v247
        %s249 = sand.u32 %s97, 1
        %s250 = scalar_lea.sflag [#allocation4], %s249
        %s251 = sand.u32 %s97, 1
        %s252 = smul.addr %s251, 8
        %s253 = scalar_lea.vmem [#allocation7], %s252
        // Predicated region
        $region41: #{tpu_custom_call.1} parent=31 // pred_check
          %p254 = pneg %p107
        $region42: #{tpu_custom_call.1} parent=31 // pred_check_branch
          %256 = sbr.rel (%p254) target = $region44
        $region43: #{tpu_custom_call.1} parent=31 // pred_region
          %258 = vsyncadd %s250, 0
          %s259 = smul.addr %s21, 8
          %s260 = scalar_lea.hbm %s3, %s259
          %s262 = sshll.u32 %s253, 4
          %s263 = int_to_ptr.vmem [resolvable:$true] %s262
          %s264 = sshll.u32 %s260, 4
          %s265 = int_to_ptr.hbm [resolvable:$true] %s264
          %267 = dma.vmem_to_hbm [thread:$0]  %s263, 128, %s265, %s250
        $region44: #{tpu_custom_call.1} parent=31 // pred_fallthru
          _
      $region32: #{tpu_custom_call.1} parent=5 // pred_fallthru
        _
      %p268 = scmp.le.s32.totalorder 2, %s16
      // Predicated region
      $region45: #{tpu_custom_call.1} parent=5 // pred_check
        %p269 = pneg %p268
      $region46: #{tpu_custom_call.1} parent=5 // pred_check_branch
        %271 = sbr.rel (%p269) target = $region48
      $region47: #{tpu_custom_call.1} parent=5 // pred_region
        %s272 = ssub.s32 %s16, 2
        // Predicated region
        $region49: #{tpu_custom_call.1} parent=47 // pred_check
          %p273 = pneg %p113
        $region50: #{tpu_custom_call.1} parent=47 // pred_check_branch
          %275 = sbr.rel (%p273) target = $region52
        $region51: #{tpu_custom_call.1} parent=47 // pred_region
          %s276 = sand.u32 %s98, 1
          %s277 = scalar_lea.sflag [#allocation4], %s276
          %s278 = sand.u32 %s98, 1
          %s279 = smul.addr %s278, 8
          %s280 = scalar_lea.vmem [#allocation7], %s279
          %282 = dma.done %s277, 128
        $region52: #{tpu_custom_call.1} parent=47 // pred_fallthru
          _
      $region48: #{tpu_custom_call.1} parent=5 // pred_fallthru
        _
    $region6: #{tpu_custom_call.1} parent=1 // loop_footer
      %s20 = sadd.s32 1, %s16
    $region7: #{tpu_custom_call.1} parent=1 // loop_footer_branch
      %15 = sbr.rel target = $region3
    $region8: #{tpu_custom_call.1} parent=1 // loop_exit
      _
    %283 = vsyncpa [#allocation3], 1
    %s284 = scalar_lea.sflag [#allocation3], 1
    %285 = vsyncpa %s284, 1
    %286 = vsyncpa [#allocation6], 1
    %287 = vsyncpa [#allocation4], 1
    %s288 = scalar_lea.sflag [#allocation4], 1
    %289 = vsyncpa %s288, 1

// kernel: tpu_custom_call.1
$region0: #{tpu_custom_call.1}
  #allocation0 [shape = 'u32[]', space=smem, size = 0x4, offset = 0x4, fixed_abs, tag = 'smem constant byte address 0x4 - core index']
  #allocation1 [shape = 'u32[72,128]{1,0:T(1,128)}', space=vmem, size = 0x9000, scoped, tag = 'internal scratch']
  %s0 = inlined_call_operand.hbm [shape: f32[16,1024], index: 0, kind: input, shape index: {}]
  %s1 = inlined_call_operand.hbm [shape: f32[128,128], index: 1, kind: input, shape index: {}]
  %s2 = inlined_call_operand.vmem [shape: f32[1,128], index: 2, kind: input, shape index: {}]
  %s3 = inlined_call_operand.hbm [shape: f32[16,128], index: 3, kind: output, shape index: {}]
  %s4 = sld [smem:[#allocation0]]
  $region53: #{tpu_custom_call.1} parent=0
    _
  %s6 = ssub.s32 1, %s4
  %s7 = scalar_select 0, %s6, %s4
  $region1: #{tpu_custom_call.1} parent=0
    #allocation2 [shape = 'u8[8192]{0}', space=vmem, size = 0x2000, scoped, tag = 'input window, operand 0']
    #allocation3 [shape = 's32[2]{0}', space=sflag, size = 0x8, scoped, tag = 'scoped memory for tpu_custom_call.1']
    #allocation4 [shape = 's32[2]{0}', space=sflag, size = 0x8, scoped, tag = 'scoped memory for tpu_custom_call.1']
    #allocation5 [shape = 'u8[65536]{0}', space=vmem, size = 0x10000, scoped, tag = 'input window, operand 1, single buffered']
    #allocation6 [shape = 's32[1]{0}', space=sflag, size = 0x4, scoped, tag = 'scoped memory for tpu_custom_call.1']
    #allocation7 [shape = 'u8[8192]{0}', space=vmem, size = 0x2000, scoped, tag = 'output window, operand 0']
    %8 = vsyncpa [#allocation3], 0
    %s9 = scalar_lea.sflag [#allocation3], 1
    %10 = vsyncpa %s9, 0
    %11 = vsyncpa [#allocation6], 0
    %12 = vsyncpa [#allocation4], 0
    %s13 = scalar_lea.sflag [#allocation4], 1
    %14 = vsyncpa %s13, 0
    loop: start=0, step=1, limit=4
    $region2: #{tpu_custom_call.1} parent=1 // loop_pre_header
      _
    $region3: #{tpu_custom_call.1} parent=1 // loop_header
      %s16 = sphi 0, %s20
      %p17 = scmp.ge.s32.totalorder %s16, 4
      %s26 = sphi 0, %s28
      %s29 = sphi 0, %s26
      %s30 = sphi 0, %s29
      %s46 = sphi 0, %s30
      %s50 = sphi 0, %s50
      %s52 = sphi 0, %s50
      %s53 = sphi 0, %s52
      %s67 = sphi 0, %s53
      %s71 = sphi 0, %s71
      %s73 = sphi 0, %s71
      %s74 = sphi 0, %s73
      %s88 = sphi 0, %s74
      %s94 = sphi 0, %s96
      %s97 = sphi 0, %s94
      %s98 = sphi 0, %s97
      %s114 = sphi 0, %s98
    $region4: #{tpu_custom_call.1} parent=1 // loop_header_branch
      %19 = sbr.rel (%p17) target = $region8
    $region5: #{tpu_custom_call.1} parent=1 // loop_body
      %s21 = ssub.s32 %s16, 1
      %s22 = ssub.s32 %s16, 2
      %s23 = sadd.s32 %s16, 1
      %s24 = ssub.s32 %s16, %s23
      %p25 = scmp.eq.s32.totalorder %s24, 0
      %s27 = sadd.s32 %s26, 1
      %s28 = scalar_select %p25, %s26, %s27
      %p31 = pneg %p25
      %p32 = scmp.eq.s32.totalorder %s16, 1
      %p33 = por %p31, %p32
      %p34 = scmp.ne.s32.totalorder %s26, %s29
      %p35 = scmp.eq.s32.totalorder %s16, 0
      %p36 = por %p34, %p35
      %p37 = scmp.ne.s32.totalorder %s26, %s29
      %p38 = scmp.eq.s32.totalorder %s21, 1
      %p39 = por %p37, %p38
      %p40 = scmp.ne.s32.totalorder %s29, %s30
      %p41 = scmp.eq.s32.totalorder %s21, 0
      %p42 = por %p40, %p41
      %p43 = scmp.ne.s32.totalorder %s29, %s30
      %p44 = scmp.eq.s32.totalorder %s22, 1
      %p45 = por %p43, %p44
      %p47 = scmp.ne.s32.totalorder %s30, %s46
      %p48 = scmp.eq.s32.totalorder %s22, 0
      %p49 = por %p47, %p48
      %s51 = sadd.s32 %s50, 1
      %p54 = scmp.eq.s32.totalorder %s16, 1
      %p55 = scmp.ne.s32.totalorder %s50, %s52
      %p56 = scmp.eq.s32.totalorder %s16, 0
      %p57 = por %p55, %p56
      %p58 = scmp.ne.s32.totalorder %s50, %s52
      %p59 = scmp.eq.s32.totalorder %s21, 1
      %p60 = por %p58, %p59
      %p61 = scmp.ne.s32.totalorder %s52, %s53
      %p62 = scmp.eq.s32.totalorder %s21, 0
      %p63 = por %p61, %p62
      %p64 = scmp.ne.s32.totalorder %s52, %s53
      %p65 = scmp.eq.s32.totalorder %s22, 1
      %p66 = por %p64, %p65
      %p68 = scmp.ne.s32.totalorder %s53, %s67
      %p69 = scmp.eq.s32.totalorder %s22, 0
      %p70 = por %p68, %p69
      %s72 = sadd.s32 %s71, 1
      %p75 = scmp.eq.s32.totalorder %s16, 1
      %p76 = scmp.ne.s32.totalorder %s71, %s73
      %p77 = scmp.eq.s32.totalorder %s16, 0
      %p78 = por %p76, %p77
      %p79 = scmp.ne.s32.totalorder %s71, %s73
      %p80 = scmp.eq.s32.totalorder %s21, 1
      %p81 = por %p79, %p80
      %p82 = scmp.ne.s32.totalorder %s73, %s74
      %p83 = scmp.eq.s32.totalorder %s21, 0
      %p84 = por %p82, %p83
      %p85 = scmp.ne.s32.totalorder %s73, %s74
      %p86 = scmp.eq.s32.totalorder %s22, 1
      %p87 = por %p85, %p86
      %p89 = scmp.ne.s32.totalorder %s74, %s88
      %p90 = scmp.eq.s32.totalorder %s22, 0
      %p91 = por %p89, %p90
      %s92 = ssub.s32 %s16, %s23
      %p93 = scmp.eq.s32.totalorder %s92, 0
      %s95 = sadd.s32 %s94, 1
      %s96 = scalar_select %p93, %s94, %s95
      %p99 = pneg %p93
      %p100 = scmp.eq.s32.totalorder %s16, 1
      %p101 = por %p99, %p100
      %p102 = scmp.ne.s32.totalorder %s94, %s97
      %p103 = scmp.eq.s32.totalorder %s16, 0
      %p104 = por %p102, %p103
      %p105 = scmp.ne.s32.totalorder %s94, %s97
      %p106 = scmp.eq.s32.totalorder %s21, 1
      %p107 = por %p105, %p106
      %p108 = scmp.ne.s32.totalorder %s97, %s98
      %p109 = scmp.eq.s32.totalorder %s21, 0
      %p110 = por %p108, %p109
      %p111 = scmp.ne.s32.totalorder %s97, %s98
      %p112 = scmp.eq.s32.totalorder %s22, 1
      %p113 = por %p111, %p112
      %p115 = scmp.ne.s32.totalorder %s98, %s114
      %p116 = scmp.eq.s32.totalorder %s22, 0
      %p117 = por %p115, %p116
      %p118 = scmp.le.s32.totalorder 1, %s16
      %p119 = scmp.lt.s32.totalorder %s16, 3
      %p120 = pnand %p118, %p119
      %p121 = pneg %p120
      // Predicated region
      $region9: #{tpu_custom_call.1} parent=5 // pred_check
        _
      $region10: #{tpu_custom_call.1} parent=5 // pred_check_branch
        %123 = sbr.rel (%p120) target = $region12
      $region11: #{tpu_custom_call.1} parent=5 // pred_region
        %s124 = ssub.s32 %s16, 1
        // Predicated region
        $region13: #{tpu_custom_call.1} parent=11 // pred_check
          %p125 = pneg %p63
        $region14: #{tpu_custom_call.1} parent=11 // pred_check_branch
          %127 = sbr.rel (%p125) target = $region16
        $region15: #{tpu_custom_call.1} parent=11 // pred_region
          %129 = vsyncadd [#allocation6], 0
          %s130 = sshll.u32 %s1, 4
          %s131 = int_to_ptr.hbm [resolvable:$true] %s130
          %s132 = sshll.u32 [#allocation5], 4
          %s133 = int_to_ptr.vmem [resolvable:$true] %s132
          %138 = dma.hbm_to_vmem [thread:$0]  %s131, 2048, %s133, [#allocation6], 128, 128, 8
        $region16: #{tpu_custom_call.1} parent=11 // pred_fallthru
          _
        // Predicated region
        $region17: #{tpu_custom_call.1} parent=11 // pred_check
          %p139 = pneg %p84
        $region18: #{tpu_custom_call.1} parent=11 // pred_check_branch
          %141 = sbr.rel (%p139) target = $region20
        $region19: #{tpu_custom_call.1} parent=11 // pred_region
          _
        $region20: #{tpu_custom_call.1} parent=11 // pred_fallthru
          _
      $region12: #{tpu_custom_call.1} parent=5 // pred_fallthru
        _
      %p142 = scmp.lt.s32.totalorder %s16, 2
      // Predicated region
      $region21: #{tpu_custom_call.1} parent=5 // pred_check
        %p143 = pneg %p142
      $region22: #{tpu_custom_call.1} parent=5 // pred_check_branch
        %145 = sbr.rel (%p143) target = $region24
      $region23: #{tpu_custom_call.1} parent=5 // pred_region
        // Predicated region
        $region25: #{tpu_custom_call.1} parent=23 // pred_check
          %p146 = pneg %p36
        $region26: #{tpu_custom_call.1} parent=23 // pred_check_branch
          %148 = sbr.rel (%p146) target = $region28
        $region27: #{tpu_custom_call.1} parent=23 // pred_region
          %s149 = sand.u32 %s26, 1
          %s150 = scalar_lea.sflag [#allocation3], %s149
          %s151 = sand.u32 %s26, 1
          %s152 = smul.addr %s151, 8
          %s153 = scalar_lea.vmem [#allocation2], %s152
          %155 = vsyncadd %s150, 0
          %s156 = smul.addr %s16, 8
          %s157 = smul.addr %s156, 8
          %s158 = scalar_lea.hbm %s0, %s157
          %s160 = sshll.u32 %s158, 4
          %s161 = int_to_ptr.hbm [resolvable:$true] %s160
          %s162 = sshll.u32 %s153, 4
          %s163 = int_to_ptr.vmem [resolvable:$true] %s162
          %165 = dma.hbm_to_vmem [thread:$0]  %s161, 128, %s163, %s150
        $region28: #{tpu_custom_call.1} parent=23 // pred_fallthru
          _
      $region24: #{tpu_custom_call.1} parent=5 // pred_fallthru
        _
      %p166 = scmp.le.s32.totalorder 1, %s16
      %p167 = scmp.lt.s32.totalorder %s16, 3
      %p168 = pnand %p166, %p167
      %p169 = pneg %p168
      // Predicated region
      $region29: #{tpu_custom_call.1} parent=5 // pred_check
        _
      $region30: #{tpu_custom_call.1} parent=5 // pred_check_branch
        %171 = sbr.rel (%p168) target = $region32
      $region31: #{tpu_custom_call.1} parent=5 // pred_region
        %s172 = ssub.s32 %s16, 1
        %s173 = sand.u32 %s29, 1
        %s174 = scalar_lea.sflag [#allocation3], %s173
        %s175 = sand.u32 %s29, 1
        %s176 = smul.addr %s175, 8
        %s177 = scalar_lea.vmem [#allocation2], %s176
        // Predicated region
        $region33: #{tpu_custom_call.1} parent=31 // pred_check
          %p178 = pneg %p42
        $region34: #{tpu_custom_call.1} parent=31 // pred_check_branch
          %180 = sbr.rel (%p178) target = $region36
        $region35: #{tpu_custom_call.1} parent=31 // pred_region
          %182 = dma.done %s174, 128
        $region36: #{tpu_custom_call.1} parent=31 // pred_fallthru
          _
        // Predicated region
        $region37: #{tpu_custom_call.1} parent=31 // pred_check
          %p183 = pneg %p63
        $region38: #{tpu_custom_call.1} parent=31 // pred_check_branch
          %185 = sbr.rel (%p183) target = $region40
        $region39: #{tpu_custom_call.1} parent=31 // pred_region
          %187 = dma.done [#allocation6], 2048
        $region40: #{tpu_custom_call.1} parent=31 // pred_fallthru
          _
        %s188 = sand.u32 %s29, 1
        %s189 = scalar_lea.sflag [#allocation3], %s188
        %s190 = sand.u32 %s29, 1
        %s191 = smul.addr %s190, 8
        %s192 = scalar_lea.vmem [#allocation2], %s191
        %p193 = pneg %p42
        %p194 = pneg %p39
        %p195 = pneg %p63
        %p196 = pneg %p60
        %p197 = pneg %p84
        %p198 = pneg %p81
        %p199 = pneg %p110
        %p200 = pneg %p107
        %s201 = sand.u32 %s97, 1
        %s202 = scalar_lea.sflag [#allocation4], %s201
        %s203 = sand.u32 %s97, 1
        %s204 = smul.addr %s203, 8
        %s205 = scalar_lea.vmem [#allocation7], %s204
        %v206 = vld [vmem:[%s177] sm:$0xff]
        %v207 = vld [vmem:[#allocation5] sm:$0xff]
        %v208 = vld [vmem:[#allocation5 + $0x8] sm:$0xff]
        %v209 = vld [vmem:[#allocation5 + $0x10] sm:$0xff]
        %v210 = vld [vmem:[#allocation5 + $0x18] sm:$0xff]
        %v211 = vld [vmem:[#allocation5 + $0x20] sm:$0xff]
        %v212 = vld [vmem:[#allocation5 + $0x28] sm:$0xff]
        %v213 = vld [vmem:[#allocation5 + $0x30] sm:$0xff]
        %v214 = vld [vmem:[#allocation5 + $0x38] sm:$0xff]
        %v215 = vld [vmem:[#allocation5 + $0x40] sm:$0xff]
        %v216 = vld [vmem:[#allocation5 + $0x48] sm:$0xff]
        %v217 = vld [vmem:[#allocation5 + $0x50] sm:$0xff]
        %v218 = vld [vmem:[#allocation5 + $0x58] sm:$0xff]
        %v219 = vld [vmem:[#allocation5 + $0x60] sm:$0xff]
        %v220 = vld [vmem:[#allocation5 + $0x68] sm:$0xff]
        %v221 = vld [vmem:[#allocation5 + $0x70] sm:$0xff]
        %v222 = vld [vmem:[#allocation5 + $0x78] sm:$0xff]
        %v223 = vld [vmem:[%s2] sm:$0x1]
        %v225 = vperm.slane %v223, 0
        %227 = vmatpush.msra.mxu0 %v222
        %228 = vmatpush.msra.mxu0 %v221
        %229 = vmatpush.msra.mxu0 %v220
        %230 = vmatpush.msra.mxu0 %v219
        %231 = vmatpush.msra.mxu0 %v218
        %232 = vmatpush.msra.mxu0 %v217
        %233 = vmatpush.msra.mxu0 %v216
        %234 = vmatpush.msra.mxu0 %v215
        %235 = vmatpush.msra.mxu0 %v214
        %236 = vmatpush.msra.mxu0 %v213
        %237 = vmatpush.msra.mxu0 %v212
        %238 = vmatpush.msra.mxu0 %v211
        %239 = vmatpush.msra.mxu0 %v210
        %240 = vmatpush.msra.mxu0 %v209
        %241 = vmatpush.msra.mxu0 %v208
        %242 = vmatpush.msra.mxu0 %v207
        %243 = vmatmul.f32.gmra.mxu0 %v206
        %v244 = vpop.f32.mrf.mxu0
        %v245 = vadd.f32 %v225, %v244
        %246 = vdwg.mxu0
        %v247 = vtanh.pop %v245
        %248 = vst [vmem:[%s205] sm:$0xff] %v247
        %s249 = sand.u32 %s97, 1
        %s250 = scalar_lea.sflag [#allocation4], %s249
        %s251 = sand.u32 %s97, 1
        %s252 = smul.addr %s251, 8
        %s253 = scalar_lea.vmem [#allocation7], %s252
        // Predicated region
        $region41: #{tpu_custom_call.1} parent=31 // pred_check
          %p254 = pneg %p107
        $region42: #{tpu_custom_call.1} parent=31 // pred_check_branch
          %256 = sbr.rel (%p254) target = $region44
        $region43: #{tpu_custom_call.1} parent=31 // pred_region
          %258 = vsyncadd %s250, 0
          %s259 = smul.addr %s21, 8
          %s260 = scalar_lea.hbm %s3, %s259
          %s262 = sshll.u32 %s253, 4
          %s263 = int_to_ptr.vmem [resolvable:$true] %s262
          %s264 = sshll.u32 %s260, 4
          %s265 = int_to_ptr.hbm [resolvable:$true] %s264
          %267 = dma.vmem_to_hbm [thread:$0]  %s263, 128, %s265, %s250
        $region44: #{tpu_custom_call.1} parent=31 // pred_fallthru
          _
      $region32: #{tpu_custom_call.1} parent=5 // pred_fallthru
        _
      %p268 = scmp.le.s32.totalorder 2, %s16
      // Predicated region
      $region45: #{tpu_custom_call.1} parent=5 // pred_check
        %p269 = pneg %p268
      $region46: #{tpu_custom_call.1} parent=5 // pred_check_branch
        %271 = sbr.rel (%p269) target = $region48
      $region47: #{tpu_custom_call.1} parent=5 // pred_region
        %s272 = ssub.s32 %s16, 2
        // Predicated region
        $region49: #{tpu_custom_call.1} parent=47 // pred_check
          %p273 = pneg %p113
        $region50: #{tpu_custom_call.1} parent=47 // pred_check_branch
          %275 = sbr.rel (%p273) target = $region52
        $region51: #{tpu_custom_call.1} parent=47 // pred_region
          %s276 = sand.u32 %s98, 1
          %s277 = scalar_lea.sflag [#allocation4], %s276
          %s278 = sand.u32 %s98, 1
          %s279 = smul.addr %s278, 8
          %s280 = scalar_lea.vmem [#allocation7], %s279
          %282 = dma.done %s277, 128
        $region52: #{tpu_custom_call.1} parent=47 // pred_fallthru
          _
      $region48: #{tpu_custom_call.1} parent=5 // pred_fallthru
        _
    $region6: #{tpu_custom_call.1} parent=1 // loop_footer
      %s20 = sadd.s32 1, %s16
    $region7: #{tpu_custom_call.1} parent=1 // loop_footer_branch
      %15 = sbr.rel target = $region3
    $region8: #{tpu_custom_call.1} parent=1 // loop_exit
      _
    %283 = vsyncpa [#allocation3], 1
    %s284 = scalar_lea.sflag [#allocation3], 1
    %285 = vsyncpa %s284, 1
    %286 = vsyncpa [#allocation6], 1
    %287 = vsyncpa [#allocation4], 1
    %s288 = scalar_lea.sflag [#allocation4], 1
    %289 = vsyncpa %s288, 1

</llo_original>
